<compile_context>
chip_gen: v6e
topology: v6e:2x2x1
jax: 0.10.0
libtpu: 0.0.40
codegen_flags: <defaults>
</compile_context>

<pallas_src>
from functools import partial

import jax
import jax.numpy as jnp
from jax.experimental import pallas as pl
from jax.experimental.pallas import tpu as pltpu

_LANE = 128
# Cap so double-buffered tiles + (32, TB) f32 intermediates fit v5e's scoped VMEM.
_MAX_TILE_B = 16384


def _ceil_to(x, m):
    return ((x + m - 1) // m) * m


def fcqsa_kernel(s_ref, a_ref, w1s_ref, w1a_ref, b1_ref, w2_ref, b2_ref,
                 w3_ref, b3_ref, o_ref):
    # Layer 1: (H1, D)bf16 @ (D, TB)bf16 -> f32 acc  [+ action term] + b1 -> ReLU
    h = jnp.dot(w1s_ref[...], s_ref[...], preferred_element_type=jnp.float32)
    if a_ref.shape[0] == 1:
        # action_dim == 1: the "matmul" is an outer product; do it on the VPU.
        h = h + (w1a_ref[...].astype(jnp.float32)
                 * a_ref[...].astype(jnp.float32))
    else:
        h = h + jnp.dot(w1a_ref[...], a_ref[...],
                        preferred_element_type=jnp.float32)
    h = jnp.maximum(h + b1_ref[...], 0.0)

    # Layer 2: bf16 MXU inputs (cast right before the dot), f32 accumulation.
    h = jnp.dot(w2_ref[...], h.astype(jnp.bfloat16),
                preferred_element_type=jnp.float32)
    h = jnp.maximum(h + b2_ref[...], 0.0)

    # Output head (H2 -> 1): VPU multiply + sublane reduce, no MXU needed.
    q = jnp.sum(h * w3_ref[...], axis=0, keepdims=True) + b3_ref[...]
    o_ref[...] = q.astype(o_ref.dtype)                             # (1, TB)


@partial(jax.jit, static_argnames=("tile_b",))
def fcqsa_forward(state, action, params, tile_b=8192):
    """state: (B, input_dim), action: (B, output_dim) -> (B, 1) float32."""
    w1s, w1a, b1, w2, b2, w3, b3 = params
    if state.ndim == 1:
        state = state[None, :]
    if action.ndim == 1:
        action = action[None, :]

    B, D = state.shape
    A = action.shape[1]
    H1 = w1s.shape[0]
    H2 = w2.shape[0]

    # Batch tile: multiple of 128, large by default (amortize per-step cost),
    # capped for v5e scoped VMEM, and split so v7x gets >= 2 tiles when B > 128.
    tb_cap = min(_ceil_to(int(tile_b), _LANE), _MAX_TILE_B)
    half = _ceil_to(-(-B // 2), _LANE)
    tb = max(_LANE, min(tb_cap, half))
    b_pad = _ceil_to(B, tb)
    grid = (b_pad // tb,)

    # Feature-major + zero-padded batch + bf16 downcast in one wrapper fusion
    # (padded columns are independent and sliced off afterwards).
    s_t = jnp.pad(state.astype(jnp.bfloat16).T, ((0, 0), (0, b_pad - B)))
    a_t = jnp.pad(action.astype(jnp.bfloat16).T, ((0, 0), (0, b_pad - B)))

    def resident(shape):
        # Weight/bias tiles: same block for every grid step -> stays in VMEM.
        return pl.BlockSpec(shape, lambda i: (0, 0))

    flops = 2 * b_pad * (H1 * (D + A) + H2 * H1 + H2)
    bytes_accessed = (b_pad * (D + A) * 2 + b_pad * 4
                      + (H1 * (D + A) + H2 * H1) * 2
                      + (H1 + 2 * H2 + 1) * 4)

    out = pl.pallas_call(
        fcqsa_kernel,
        out_shape=jax.ShapeDtypeStruct((1, b_pad), jnp.float32),
        grid=grid,
        in_specs=[
            pl.BlockSpec((D, tb), lambda i: (0, i)),   # state (feature-major, bf16)
            pl.BlockSpec((A, tb), lambda i: (0, i)),   # action (feature-major, bf16)
            resident((H1, D)),                         # w1_state   (bf16)
            resident((H1, A)),                         # w1_action  (bf16)
            resident((H1, 1)),                         # b1         (f32)
            resident((H2, H1)),                        # w2         (bf16)
            resident((H2, 1)),                         # b2         (f32)
            resident((H2, 1)),                         # w3 column  (f32)
            resident((1, 1)),                          # b3         (f32)
        ],
        out_specs=pl.BlockSpec((1, tb), lambda i: (0, i)),  # lane-dense output
        compiler_params=pltpu.CompilerParams(
            dimension_semantics=("parallel",),
            vmem_limit_bytes=32 * 1024 * 1024),
        cost_estimate=pl.CostEstimate(flops=flops, transcendentals=0,
                                      bytes_accessed=bytes_accessed),
    )(s_t, a_t, w1s, w1a, b1, w2, b2, w3, b3)

    return out[:, :B].reshape(B, 1)


def init_params(key, input_dim, output_dim, hidden_dims=(32, 32)):
    """PyTorch-default-style init (uniform +/- 1/sqrt(fan_in)), kernel-ready.

    Weights are [out_features, in_features] (PyTorch's native layout); the
    MXU-fed matrices (w1_state, w1_action, w2) are stored bf16, biases and the
    VPU-only output column w3 stay f32; W1 is split into state/action parts.
    """
    assert len(hidden_dims) == 2, "kernel specialized to two hidden layers"
    h1, h2 = hidden_dims
    d_in = input_dim + output_dim

    def linear(k, fan_in, fan_out):
        kw, kb = jax.random.split(k)
        bound = 1.0 / (fan_in ** 0.5)
        w = jax.random.uniform(kw, (fan_out, fan_in), jnp.float32, -bound, bound)
        b = jax.random.uniform(kb, (fan_out, 1), jnp.float32, -bound, bound)
        return w, b

    k1, k2, k3 = jax.random.split(key, 3)
    w1, b1 = linear(k1, d_in, h1)        # (H1, D+A), (H1, 1)
    w2, b2 = linear(k2, h1, h2)          # (H2, H1),  (H2, 1)
    w3r, b3 = linear(k3, h2, 1)          # (1, H2),   (1, 1)

    w1s = w1[:, :input_dim].astype(jnp.bfloat16)
    w1a = w1[:, input_dim:].astype(jnp.bfloat16)
    w2 = w2.astype(jnp.bfloat16)
    w3 = w3r.T                           # (H2, 1) f32 column for the VPU reduce
    return (w1s, w1a, b1, w2, b2, w3, b3)


def _reference_f32(state, action, params):
    """Pure-f32 reference (module semantics)."""
    w1s, w1a, b1, w2, b2, w3, b3 = params
    w1 = jnp.concatenate([w1s.astype(jnp.float32), w1a.astype(jnp.float32)], axis=1)
    xu = jnp.concatenate([state, action], axis=1)
    h = jnp.maximum(xu @ w1.T + b1[:, 0], 0.0)
    h = jnp.maximum(h @ w2.astype(jnp.float32).T + b2[:, 0], 0.0)
    return h @ w3 + b3[0]


def _reference_kernel_precision(state, action, params):
    """Reference that emulates the kernel's bf16-input / f32-accumulate math."""
    w1s, w1a, b1, w2, b2, w3, b3 = params
    s = state.astype(jnp.bfloat16).astype(jnp.float32)
    a = action.astype(jnp.bfloat16).astype(jnp.float32)
    h = (s @ w1s.astype(jnp.float32).T + a @ w1a.astype(jnp.float32).T
         + b1[:, 0])
    h = jnp.maximum(h, 0.0)
    h = (h.astype(jnp.bfloat16).astype(jnp.float32)
         @ w2.astype(jnp.float32).T + b2[:, 0])
    h = jnp.maximum(h, 0.0)
    return h @ w3 + b3[0]


if __name__ == "__main__":
    key = jax.random.PRNGKey(0)
    k_state, k_action, k_params, k_big = jax.random.split(key, 4)

    batch = 8
    input_dim = 6    # gas-storage env observation features
    output_dim = 1   # action dimension
    hidden_dims = (32, 32)

    state = jax.random.normal(k_state, (batch, input_dim), jnp.float32)
    action = jax.random.normal(k_action, (batch, output_dim), jnp.float32)
    params = init_params(k_params, input_dim, output_dim, hidden_dims)

    q = jax.block_until_ready(fcqsa_forward(state, action, params))
    assert q.shape == (batch, 1)

    ref_kp = _reference_kernel_precision(state, action, params)
    ref_f32 = _reference_f32(state, action, params)
    assert jnp.allclose(q, ref_kp, atol=2e-3, rtol=2e-3)
    assert jnp.allclose(q, ref_f32, atol=6e-2, rtol=6e-2)

    # Second run exercising the batch grid (padding + multiple tiles).
    kb1, kb2 = jax.random.split(k_big)
    big_b = 300
    state_b = jax.random.normal(kb1, (big_b, input_dim), jnp.float32)
    action_b = jax.random.normal(kb2, (big_b, output_dim), jnp.float32)
    q_b = jax.block_until_ready(
        fcqsa_forward(state_b, action_b, params, tile_b=128))
    assert q_b.shape == (big_b, 1)
    assert jnp.allclose(q_b, _reference_kernel_precision(state_b, action_b, params),
                        atol=2e-3, rtol=2e-3)
    assert jnp.allclose(q_b, _reference_f32(state_b, action_b, params),
                        atol=6e-2, rtol=6e-2)

    print("KERNEL_OK")
</pallas_src>

<mosaic_0001>
module attributes {stable_mosaic.version = 11 : i64} {
  func.func @fcqsa_kernel(%arg0: i32, %arg1: memref<6x128xbf16, #tpu.memory_space<vmem>>, %arg2: memref<1x128xbf16, #tpu.memory_space<vmem>>, %arg3: memref<32x6xbf16, #tpu.memory_space<vmem>>, %arg4: memref<32x1xbf16, #tpu.memory_space<vmem>>, %arg5: memref<32x1xf32, #tpu.memory_space<vmem>>, %arg6: memref<32x32xbf16, #tpu.memory_space<vmem>>, %arg7: memref<32x1xf32, #tpu.memory_space<vmem>>, %arg8: memref<32x1xf32, #tpu.memory_space<vmem>>, %arg9: memref<1x1xf32, #tpu.memory_space<vmem>>, %arg10: memref<1x128xf32, #tpu.memory_space<vmem>>) attributes {dimension_semantics = [#tpu.dimension_semantics<parallel>], iteration_bounds = array<i64: 1>, scalar_prefetch = 0 : i64, scratch_operands = 0 : i64, tpu.core_type = #tpu.core_type<tc>, window_params = [{transform_indices = @transform_0, window_bounds = array<i64: 6, 128>}, {transform_indices = @transform_1, window_bounds = array<i64: 1, 128>}, {pipeline_mode = #tpu.pipeline_mode<synchronous>, transform_indices = @transform_2, window_bounds = array<i64: 32, 6>}, {pipeline_mode = #tpu.pipeline_mode<synchronous>, transform_indices = @transform_3, window_bounds = array<i64: 32, 1>}, {pipeline_mode = #tpu.pipeline_mode<synchronous>, transform_indices = @transform_4, window_bounds = array<i64: 32, 1>}, {pipeline_mode = #tpu.pipeline_mode<synchronous>, transform_indices = @transform_5, window_bounds = array<i64: 32, 32>}, {pipeline_mode = #tpu.pipeline_mode<synchronous>, transform_indices = @transform_6, window_bounds = array<i64: 32, 1>}, {pipeline_mode = #tpu.pipeline_mode<synchronous>, transform_indices = @transform_7, window_bounds = array<i64: 32, 1>}, {pipeline_mode = #tpu.pipeline_mode<synchronous>, transform_indices = @transform_8, window_bounds = array<i64: 1, 1>}, {transform_indices = @transform_9, window_bounds = array<i64: 1, 128>}]} {
    %c0 = arith.constant 0 : index
    %c0_0 = arith.constant 0 : index
    %0 = vector.load %arg3[%c0, %c0_0] : memref<32x6xbf16, #tpu.memory_space<vmem>>, vector<32x6xbf16>
    %c0_1 = arith.constant 0 : index
    %c0_2 = arith.constant 0 : index
    %1 = vector.load %arg1[%c0_1, %c0_2] : memref<6x128xbf16, #tpu.memory_space<vmem>>, vector<6x128xbf16>
    %cst = arith.constant dense<0.000000e+00> : vector<32x128xf32>
    %2 = tpu.matmul %0, %1, %cst {dimension_numbers = #tpu.dot_dimension_numbers<[1], [0], [0], [1], [0, 0, 1, 1], [], []>} : vector<32x6xbf16>, vector<6x128xbf16>, vector<32x128xf32> -> vector<32x128xf32>
    %c0_3 = arith.constant 0 : index
    %c0_4 = arith.constant 0 : index
    %3 = vector.load %arg4[%c0_3, %c0_4] : memref<32x1xbf16, #tpu.memory_space<vmem>>, vector<32x1xbf16>
    %4 = arith.extf %3 : vector<32x1xbf16> to vector<32x1xf32>
    %c0_5 = arith.constant 0 : index
    %c0_6 = arith.constant 0 : index
    %5 = vector.load %arg2[%c0_5, %c0_6] : memref<1x128xbf16, #tpu.memory_space<vmem>>, vector<1x128xbf16>
    %6 = arith.extf %5 : vector<1x128xbf16> to vector<1x128xf32>
    %7 = vector.broadcast %4 : vector<32x1xf32> to vector<32x128xf32>
    %8 = vector.broadcast %6 : vector<1x128xf32> to vector<32x128xf32>
    %9 = arith.mulf %7, %8 : vector<32x128xf32>
    %10 = arith.addf %2, %9 : vector<32x128xf32>
    %c0_7 = arith.constant 0 : index
    %c0_8 = arith.constant 0 : index
    %11 = vector.load %arg5[%c0_7, %c0_8] : memref<32x1xf32, #tpu.memory_space<vmem>>, vector<32x1xf32>
    %12 = vector.broadcast %11 : vector<32x1xf32> to vector<32x128xf32>
    %13 = arith.addf %10, %12 : vector<32x128xf32>
    %cst_9 = arith.constant 0.000000e+00 : f32
    %14 = vector.broadcast %cst_9 : f32 to vector<32x128xf32>
    %15 = arith.maximumf %13, %14 : vector<32x128xf32>
    %c0_10 = arith.constant 0 : index
    %c0_11 = arith.constant 0 : index
    %16 = vector.load %arg6[%c0_10, %c0_11] : memref<32x32xbf16, #tpu.memory_space<vmem>>, vector<32x32xbf16>
    %17 = arith.truncf %15 : vector<32x128xf32> to vector<32x128xbf16>
    %cst_12 = arith.constant dense<0.000000e+00> : vector<32x128xf32>
    %18 = tpu.matmul %16, %17, %cst_12 {dimension_numbers = #tpu.dot_dimension_numbers<[1], [0], [0], [1], [0, 0, 1, 1], [], []>} : vector<32x32xbf16>, vector<32x128xbf16>, vector<32x128xf32> -> vector<32x128xf32>
    %c0_13 = arith.constant 0 : index
    %c0_14 = arith.constant 0 : index
    %19 = vector.load %arg7[%c0_13, %c0_14] : memref<32x1xf32, #tpu.memory_space<vmem>>, vector<32x1xf32>
    %20 = vector.broadcast %19 : vector<32x1xf32> to vector<32x128xf32>
    %21 = arith.addf %18, %20 : vector<32x128xf32>
    %cst_15 = arith.constant 0.000000e+00 : f32
    %22 = vector.broadcast %cst_15 : f32 to vector<32x128xf32>
    %23 = arith.maximumf %21, %22 : vector<32x128xf32>
    %c0_16 = arith.constant 0 : index
    %c0_17 = arith.constant 0 : index
    %24 = vector.load %arg8[%c0_16, %c0_17] : memref<32x1xf32, #tpu.memory_space<vmem>>, vector<32x1xf32>
    %25 = vector.broadcast %24 : vector<32x1xf32> to vector<32x128xf32>
    %26 = arith.mulf %23, %25 : vector<32x128xf32>
    %cst_18 = arith.constant dense<0.000000e+00> : vector<128xf32>
    %27 = vector.multi_reduction <add>, %26, %cst_18 [0] : vector<32x128xf32> to vector<128xf32>
    %28 = vector.shape_cast %27 : vector<128xf32> to vector<1x128xf32>
    %c0_19 = arith.constant 0 : index
    %c0_20 = arith.constant 0 : index
    %29 = vector.load %arg9[%c0_19, %c0_20] : memref<1x1xf32, #tpu.memory_space<vmem>>, vector<1x1xf32>
    %30 = vector.broadcast %29 : vector<1x1xf32> to vector<1x128xf32>
    %31 = arith.addf %28, %30 : vector<1x128xf32>
    %c0_21 = arith.constant 0 : index
    %c0_22 = arith.constant 0 : index
    %32 = vector.load %arg10[%c0_21, %c0_22] : memref<1x128xf32, #tpu.memory_space<vmem>>, vector<1x128xf32>
    tpu.vector_store %arg10[%c0_21, %c0_22], %31 {strides = array<i32>} : memref<1x128xf32, #tpu.memory_space<vmem>>, vector<1x128xf32>,
    return
  }
  func.func @transform_0(%arg0: i32) -> (i32, i32) {
    %c0_i32 = arith.constant 0 : i32
    %c0_i32_0 = arith.constant 0 : i32
    return %c0_i32, %arg0 : i32, i32
  }
  func.func @transform_1(%arg0: i32) -> (i32, i32) {
    %c0_i32 = arith.constant 0 : i32
    %c0_i32_0 = arith.constant 0 : i32
    return %c0_i32, %arg0 : i32, i32
  }
  func.func @transform_2(%arg0: i32) -> (i32, i32) {
    %c0_i32 = arith.constant 0 : i32
    %c0_i32_0 = arith.constant 0 : i32
    %c0_i32_1 = arith.constant 0 : i32
    return %c0_i32, %c0_i32_0 : i32, i32
  }
  func.func @transform_3(%arg0: i32) -> (i32, i32) {
    %c0_i32 = arith.constant 0 : i32
    %c0_i32_0 = arith.constant 0 : i32
    %c0_i32_1 = arith.constant 0 : i32
    return %c0_i32, %c0_i32_0 : i32, i32
  }
  func.func @transform_4(%arg0: i32) -> (i32, i32) {
    %c0_i32 = arith.constant 0 : i32
    %c0_i32_0 = arith.constant 0 : i32
    %c0_i32_1 = arith.constant 0 : i32
    return %c0_i32, %c0_i32_0 : i32, i32
  }
  func.func @transform_5(%arg0: i32) -> (i32, i32) {
    %c0_i32 = arith.constant 0 : i32
    %c0_i32_0 = arith.constant 0 : i32
    %c0_i32_1 = arith.constant 0 : i32
    return %c0_i32, %c0_i32_0 : i32, i32
  }
  func.func @transform_6(%arg0: i32) -> (i32, i32) {
    %c0_i32 = arith.constant 0 : i32
    %c0_i32_0 = arith.constant 0 : i32
    %c0_i32_1 = arith.constant 0 : i32
    return %c0_i32, %c0_i32_0 : i32, i32
  }
  func.func @transform_7(%arg0: i32) -> (i32, i32) {
    %c0_i32 = arith.constant 0 : i32
    %c0_i32_0 = arith.constant 0 : i32
    %c0_i32_1 = arith.constant 0 : i32
    return %c0_i32, %c0_i32_0 : i32, i32
  }
  func.func @transform_8(%arg0: i32) -> (i32, i32) {
    %c0_i32 = arith.constant 0 : i32
    %c0_i32_0 = arith.constant 0 : i32
    %c0_i32_1 = arith.constant 0 : i32
    return %c0_i32, %c0_i32_0 : i32, i32
  }
  func.func @transform_9(%arg0: i32) -> (i32, i32) {
    %c0_i32 = arith.constant 0 : i32
    %c0_i32_0 = arith.constant 0 : i32
    return %c0_i32, %arg0 : i32, i32
  }
}

</mosaic_0001>

<llo_original>
// kernel: fcqsa_forward.1
$region0: #{fcqsa_forward.1}
  #allocation0 [shape = 'u32[]', space=smem, size = 0x4, offset = 0x4, fixed_abs, tag = 'smem constant byte address 0x4 - core index']
  #allocation1 [shape = 'u32[144,128]{1,0:T(1,128)}', space=vmem, size = 0x12000, scoped, tag = 'internal scratch']
  #allocation2 [shape = 'f32[1,1]{1,0:T(1,128)S(1)}', space=vmem, size = 0x200, scoped, tag = 'scoped memory for fcqsa_forward.1']
  %s0 = inlined_call_operand.vmem [shape: bf16[6,128], index: 0, kind: input, shape index: {}]
  %s1 = inlined_call_operand.vmem [shape: bf16[1,128], index: 1, kind: input, shape index: {}]
  %s2 = inlined_call_operand.vmem [shape: bf16[32,6], index: 2, kind: input, shape index: {}]
  %s3 = inlined_call_operand.vmem [shape: bf16[32,1], index: 3, kind: input, shape index: {}]
  %s4 = inlined_call_operand.vmem [shape: f32[32,1], index: 4, kind: input, shape index: {}]
  %s5 = inlined_call_operand.vmem [shape: bf16[32,32], index: 5, kind: input, shape index: {}]
  %s6 = inlined_call_operand.vmem [shape: f32[32,1], index: 6, kind: input, shape index: {}]
  %s7 = inlined_call_operand.vmem [shape: f32[32,1], index: 7, kind: input, shape index: {}]
  %s8 = inlined_call_operand.<no memory space> [shape: f32[1,1], index: 8, kind: input, shape index: {}]
  %s9 = inlined_call_operand.vmem [shape: f32[1,128], index: 9, kind: output, shape index: {}]
  %s10 = sld [smem:[#allocation0]]
  $region46: #{fcqsa_forward.1} parent=0
    _
  %s12 = ssub.s32 1, %s10
  %s13 = scalar_select 0, %s12, %s10
  %v14 = vstv %s8
  %15 = vst [vmem:[#allocation2] sm:$0x1] %v14
  // Predicated region
  $region2: #{fcqsa_forward.1} parent=0 // pred_check
    _
  $region3: #{fcqsa_forward.1} parent=0 // pred_check_branch
    %17 = sbr.rel (0) target = $region5
  $region4: #{fcqsa_forward.1} parent=0 // pred_region
    _
  $region5: #{fcqsa_forward.1} parent=0 // pred_fallthru
    _
  // Predicated region
  $region6: #{fcqsa_forward.1} parent=0 // pred_check
    _
  $region7: #{fcqsa_forward.1} parent=0 // pred_check_branch
    %19 = sbr.rel (0) target = $region9
  $region8: #{fcqsa_forward.1} parent=0 // pred_region
    _
  $region9: #{fcqsa_forward.1} parent=0 // pred_fallthru
    _
  // Predicated region
  $region10: #{fcqsa_forward.1} parent=0 // pred_check
    _
  $region11: #{fcqsa_forward.1} parent=0 // pred_check_branch
    %21 = sbr.rel (0) target = $region13
  $region12: #{fcqsa_forward.1} parent=0 // pred_region
    _
  $region13: #{fcqsa_forward.1} parent=0 // pred_fallthru
    _
  // Predicated region
  $region14: #{fcqsa_forward.1} parent=0 // pred_check
    _
  $region15: #{fcqsa_forward.1} parent=0 // pred_check_branch
    %23 = sbr.rel (0) target = $region17
  $region16: #{fcqsa_forward.1} parent=0 // pred_region
    _
  $region17: #{fcqsa_forward.1} parent=0 // pred_fallthru
    _
  // Predicated region
  $region18: #{fcqsa_forward.1} parent=0 // pred_check
    _
  $region19: #{fcqsa_forward.1} parent=0 // pred_check_branch
    %25 = sbr.rel (0) target = $region21
  $region20: #{fcqsa_forward.1} parent=0 // pred_region
    _
  $region21: #{fcqsa_forward.1} parent=0 // pred_fallthru
    _
  // Predicated region
  $region22: #{fcqsa_forward.1} parent=0 // pred_check
    _
  $region23: #{fcqsa_forward.1} parent=0 // pred_check_branch
    %27 = sbr.rel (0) target = $region25
  $region24: #{fcqsa_forward.1} parent=0 // pred_region
    _
  $region25: #{fcqsa_forward.1} parent=0 // pred_fallthru
    _
  // Predicated region
  $region26: #{fcqsa_forward.1} parent=0 // pred_check
    _
  $region27: #{fcqsa_forward.1} parent=0 // pred_check_branch
    %29 = sbr.rel (0) target = $region29
  $region28: #{fcqsa_forward.1} parent=0 // pred_region
    _
  $region29: #{fcqsa_forward.1} parent=0 // pred_fallthru
    _
  // Predicated region
  $region30: #{fcqsa_forward.1} parent=0 // pred_check
    _
  $region31: #{fcqsa_forward.1} parent=0 // pred_check_branch
    %31 = sbr.rel (0) target = $region33
  $region32: #{fcqsa_forward.1} parent=0 // pred_region
    _
  $region33: #{fcqsa_forward.1} parent=0 // pred_fallthru
    _
  // Predicated region
  $region34: #{fcqsa_forward.1} parent=0 // pred_check
    _
  $region35: #{fcqsa_forward.1} parent=0 // pred_check_branch
    %33 = sbr.rel (0) target = $region37
  $region36: #{fcqsa_forward.1} parent=0 // pred_region
    _
  $region37: #{fcqsa_forward.1} parent=0 // pred_fallthru
    _
  %v35 = vld [vmem:[%s2] sm:$0xf]
  %v36 = vld [vmem:[%s2 + $0x4] sm:$0xf]
  %v37 = vld [vmem:[%s2 + $0x8] sm:$0xf]
  %v38 = vld [vmem:[%s2 + $0xc] sm:$0xf]
  %v39 = vld [vmem:[%s0] sm:$0x7]
  %v40 = vld [vmem:[%s3] sm:$0xf]
  %v41 = vld [vmem:[%s3 + $0x4] sm:$0xf]
  %v42 = vld [vmem:[%s3 + $0x8] sm:$0xf]
  %v43 = vld [vmem:[%s3 + $0xc] sm:$0xf]
  %v44 = vunpack.c.l.bf16 %v40
  %v45 = vunpack.c.l.bf16 %v41
  %v46 = vunpack.c.l.bf16 %v42
  %v47 = vunpack.c.l.bf16 %v43
  %v48 = vld [vmem:[%s1] sm:$0x1]
  %v49 = vunpack.c.l.bf16 %v48
  %51 = vset.pattern.permute.xlu0 0
  %52 = vperm.xlu0 %51, %v44
  %v53 = vpop.permute.xlu0 %52
  %56 = vset.pattern.permute.xlu0 0
  %57 = vperm.xlu0 %56, %v45
  %v58 = vpop.permute.xlu0 %57
  %61 = vset.pattern.permute.xlu0 0
  %62 = vperm.xlu0 %61, %v46
  %v63 = vpop.permute.xlu0 %62
  %66 = vset.pattern.permute.xlu0 0
  %67 = vperm.xlu0 %66, %v47
  %v68 = vpop.permute.xlu0 %67
  %v70 = vlaneseq
  %v71 = vshrl.u32 %v70, 7
  %v72 = vsub.s32 0, %v71
  %v73 = vrot.slane %v49, %v72
  %v74 = vmul.f32 %v53, %v73
  %v75 = vmul.f32 %v58, %v73
  %v76 = vmul.f32 %v63, %v73
  %v77 = vmul.f32 %v68, %v73
  %v82 = vunpack.c.l.b16 %v35
  %v83 = vunpack.c.l.b16 %v36
  %v84 = vunpack.c.l.b16 %v37
  %v85 = vunpack.c.l.b16 %v38
  %v86 = vpack.c.b16 %v83, %v82
  %v87 = vpack.c.b16 %v85, %v84
  %vm88 = vcmask 48128
  %v90 = vsel %vm88, %v86, 0
  %v93 = vsel %vm88, %v87, 0
  %vm95 = vcmask 1042432
  %v97 = vsel %vm95, %v39, 0
  %99 = vmatprep.subr.bf16.mxu0 0
  %100 = vmatpush1.bf16.msra.mxu0 0
  %101 = vmatprep.subr.bf16.mxu0 0
  %102 = vmatpush1.bf16.msra.mxu0 0
  %103 = vmatprep.subr.bf16.mxu0 0
  %104 = vmatpush1.bf16.msra.mxu0 0
  %105 = vmatprep.subr.bf16.mxu0 0
  %106 = vmatpush1.bf16.msra.mxu0 0
  %107 = vmatprep.subr.bf16.mxu0 0
  %108 = vmatpush1.bf16.msra.mxu0 0
  %109 = vmatprep.subr.bf16.mxu0 0
  %110 = vmatpush1.bf16.msra.mxu0 0
  %111 = vmatprep.subr.bf16.mxu0 0
  %112 = vmatpush1.bf16.msra.mxu0 0
  %113 = vmatprep.subr.bf16.mxu0 0
  %114 = vmatpush1.bf16.msra.mxu0 %v97
  %115 = vmatprep.subr.bf16.mxu0 0
  %116 = vmatpush2.bf16.msra.mxu0 0
  %117 = vmatprep.subr.bf16.mxu0 0
  %118 = vmatpush2.bf16.msra.mxu0 0
  %119 = vmatprep.subr.bf16.mxu0 0
  %120 = vmatpush2.bf16.msra.mxu0 0
  %121 = vmatprep.subr.bf16.mxu0 0
  %122 = vmatpush2.bf16.msra.mxu0 0
  %123 = vmatprep.subr.bf16.mxu0 0
  %124 = vmatpush2.bf16.msra.mxu0 0
  %125 = vmatprep.subr.bf16.mxu0 0
  %126 = vmatpush2.bf16.msra.mxu0 0
  %127 = vmatprep.subr.bf16.mxu0 0
  %128 = vmatpush2.bf16.msra.mxu0 0
  %129 = vmatprep.subr.bf16.mxu0 0
  %130 = vmatpush2.bf16.msra.mxu0 0
  %131 = vmatprep.mubr.bf16.mxu0 0
  %132 = vmatmul.mubr.bf16.gmra.mxu0 %v90
  %v133 = vpop.f32.mrf.mxu0
  %v134 = vadd.f32 %v74, %v133
  %v135 = vpop.f32.mrf.mxu0
  %v136 = vpop.f32.mrf.mxu0
  %v137 = vadd.f32 %v75, %v136
  %v138 = vpop.f32.mrf.mxu0
  %139 = vmatprep.mubr.bf16.mxu0 0
  %140 = vmatmul.mubr.bf16.gmra.mxu0 %v93
  %v141 = vpop.f32.mrf.mxu0
  %v142 = vadd.f32 %v76, %v141
  %v143 = vpop.f32.mrf.mxu0
  %v144 = vpop.f32.mrf.mxu0
  %v145 = vadd.f32 %v77, %v144
  %v146 = vpop.f32.mrf.mxu0
  %147 = vdwg.mxu0
  %v148 = vld [vmem:[%s4] sm:$0xff]
  %v149 = vld [vmem:[%s4 + $0x8] sm:$0xff]
  %v150 = vld [vmem:[%s4 + $0x10] sm:$0xff]
  %v151 = vld [vmem:[%s4 + $0x18] sm:$0xff]
  %153 = vset.pattern.permute.xlu0 0
  %154 = vperm.xlu0 %153, %v148
  %v155 = vpop.permute.xlu0 %154
  %158 = vset.pattern.permute.xlu0 0
  %159 = vperm.xlu0 %158, %v149
  %v160 = vpop.permute.xlu0 %159
  %163 = vset.pattern.permute.xlu0 0
  %164 = vperm.xlu0 %163, %v150
  %v165 = vpop.permute.xlu0 %164
  %168 = vset.pattern.permute.xlu0 0
  %169 = vperm.xlu0 %168, %v151
  %v170 = vpop.permute.xlu0 %169
  %v172 = vadd.f32 %v134, %v155
  %v173 = vadd.f32 %v137, %v160
  %v174 = vadd.f32 %v142, %v165
  %v175 = vadd.f32 %v145, %v170
  %v176 = vmax.f32 %v172, 0.0
  %v177 = vmax.f32 %v173, 0.0
  %v178 = vmax.f32 %v174, 0.0
  %v179 = vmax.f32 %v175, 0.0
  %v180 = vld [vmem:[%s5] sm:$0xf]
  %v181 = vld [vmem:[%s5 + $0x4] sm:$0xf]
  %v182 = vld [vmem:[%s5 + $0x8] sm:$0xf]
  %v183 = vld [vmem:[%s5 + $0xc] sm:$0xf]
  %v184 = vpack.c.bf16 %v177, %v176
  %v185 = vpack.c.bf16 %v179, %v178
  %v186 = vld [vmem:[%s6] sm:$0xff]
  %v187 = vld [vmem:[%s6 + $0x8] sm:$0xff]
  %v188 = vld [vmem:[%s6 + $0x10] sm:$0xff]
  %v189 = vld [vmem:[%s6 + $0x18] sm:$0xff]
  %191 = vset.pattern.permute.xlu0 0
  %192 = vperm.xlu0 %191, %v186
  %v193 = vpop.permute.xlu0 %192
  %196 = vset.pattern.permute.xlu0 0
  %197 = vperm.xlu0 %196, %v187
  %v198 = vpop.permute.xlu0 %197
  %201 = vset.pattern.permute.xlu0 0
  %202 = vperm.xlu0 %201, %v188
  %v203 = vpop.permute.xlu0 %202
  %206 = vset.pattern.permute.xlu0 0
  %207 = vperm.xlu0 %206, %v189
  %v208 = vpop.permute.xlu0 %207
  %v214 = vunpack.c.l.b16 %v180
  %v215 = vunpack.c.l.b16 %v181
  %v216 = vunpack.c.l.b16 %v182
  %v217 = vunpack.c.l.b16 %v183
  %v218 = vpack.c.b16 %v215, %v214
  %v219 = vpack.c.b16 %v217, %v216
  %vm220 = vcmask 261120
  %v222 = vsel %vm220, %v218, 0
  %v225 = vsel %vm220, %v219, 0
  %227 = vmatprep.subr.bf16.mxu0 0
  %228 = vmatpush1.bf16.msra.mxu0 0
  %229 = vmatprep.subr.bf16.mxu0 0
  %230 = vmatpush1.bf16.msra.mxu0 0
  %231 = vmatprep.subr.bf16.mxu0 0
  %232 = vmatpush1.bf16.msra.mxu0 0
  %233 = vmatprep.subr.bf16.mxu0 0
  %234 = vmatpush1.bf16.msra.mxu0 0
  %235 = vmatprep.subr.bf16.mxu0 0
  %236 = vmatpush1.bf16.msra.mxu0 0
  %237 = vmatprep.subr.bf16.mxu0 0
  %238 = vmatpush1.bf16.msra.mxu0 0
  %239 = vmatprep.subr.bf16.mxu0 0
  %240 = vmatpush1.bf16.msra.mxu0 %v185
  %241 = vmatprep.subr.bf16.mxu0 0
  %242 = vmatpush1.bf16.msra.mxu0 %v184
  %243 = vmatprep.subr.bf16.mxu0 0
  %244 = vmatpush2.bf16.msra.mxu0 0
  %245 = vmatprep.subr.bf16.mxu0 0
  %246 = vmatpush2.bf16.msra.mxu0 0
  %247 = vmatprep.subr.bf16.mxu0 0
  %248 = vmatpush2.bf16.msra.mxu0 0
  %249 = vmatprep.subr.bf16.mxu0 0
  %250 = vmatpush2.bf16.msra.mxu0 0
  %251 = vmatprep.subr.bf16.mxu0 0
  %252 = vmatpush2.bf16.msra.mxu0 0
  %253 = vmatprep.subr.bf16.mxu0 0
  %254 = vmatpush2.bf16.msra.mxu0 0
  %255 = vmatprep.subr.bf16.mxu0 0
  %256 = vmatpush2.bf16.msra.mxu0 0
  %257 = vmatprep.subr.bf16.mxu0 0
  %258 = vmatpush2.bf16.msra.mxu0 0
  %259 = vmatprep.mubr.bf16.mxu0 0
  %260 = vmatmul.mubr.bf16.gmra.mxu0 %v222
  %v261 = vpop.f32.mrf.mxu0
  %v262 = vadd.f32 %v193, %v261
  %v263 = vpop.f32.mrf.mxu0
  %v264 = vpop.f32.mrf.mxu0
  %v265 = vadd.f32 %v198, %v264
  %v266 = vpop.f32.mrf.mxu0
  %267 = vmatprep.mubr.bf16.mxu0 0
  %268 = vmatmul.mubr.bf16.gmra.mxu0 %v225
  %v269 = vpop.f32.mrf.mxu0
  %v270 = vadd.f32 %v203, %v269
  %v271 = vpop.f32.mrf.mxu0
  %v272 = vpop.f32.mrf.mxu0
  %v273 = vadd.f32 %v208, %v272
  %v274 = vpop.f32.mrf.mxu0
  %275 = vdwg.mxu0
  %v276 = vmax.f32 %v262, 0.0
  %v277 = vmax.f32 %v265, 0.0
  %v278 = vmax.f32 %v270, 0.0
  %v279 = vmax.f32 %v273, 0.0
  %v280 = vld [vmem:[%s7] sm:$0xff]
  %v281 = vld [vmem:[%s7 + $0x8] sm:$0xff]
  %v282 = vld [vmem:[%s7 + $0x10] sm:$0xff]
  %v283 = vld [vmem:[%s7 + $0x18] sm:$0xff]
  %285 = vset.pattern.permute.xlu0 0
  %286 = vperm.xlu0 %285, %v280
  %v287 = vpop.permute.xlu0 %286
  %290 = vset.pattern.permute.xlu0 0
  %291 = vperm.xlu0 %290, %v281
  %v292 = vpop.permute.xlu0 %291
  %295 = vset.pattern.permute.xlu0 0
  %296 = vperm.xlu0 %295, %v282
  %v297 = vpop.permute.xlu0 %296
  %300 = vset.pattern.permute.xlu0 0
  %301 = vperm.xlu0 %300, %v283
  %v302 = vpop.permute.xlu0 %301
  %v304 = vmul.f32 %v276, %v287
  %v305 = vmul.f32 %v277, %v292
  %v306 = vmul.f32 %v278, %v297
  %v307 = vmul.f32 %v279, %v302
  %v308 = vadd.f32 %v304, %v305
  %v309 = vadd.f32 %v308, %v306
  %v310 = vadd.f32 %v309, %v307
  %v311 = vrot.slane %v310, 4
  %v312 = vadd.f32 %v310, %v311
  %v313 = vrot.slane %v312, 2
  %v314 = vadd.f32 %v312, %v313
  %v315 = vrot.slane %v314, 1
  %v316 = vadd.f32 %v314, %v315
  %v317 = vld [vmem:[#allocation2] sm:$0x1]
  %319 = vset.pattern.permute.xlu0 0
  %320 = vperm.xlu0 %319, %v317
  %v321 = vpop.permute.xlu0 %320
  %v323 = vlaneseq
  %v324 = vshrl.u32 %v323, 7
  %v325 = vsub.s32 0, %v324
  %v326 = vrot.slane %v321, %v325
  %v327 = vadd.f32 %v316, %v326
  %328 = vst [vmem:[%s9] sm:$0x1] %v327
  // Predicated region
  $region38: #{fcqsa_forward.1} parent=0 // pred_check
    _
  $region39: #{fcqsa_forward.1} parent=0 // pred_check_branch
    %330 = sbr.rel (0) target = $region41
  $region40: #{fcqsa_forward.1} parent=0 // pred_region
    _
  $region41: #{fcqsa_forward.1} parent=0 // pred_fallthru
    _
  // Predicated region
  $region42: #{fcqsa_forward.1} parent=0 // pred_check
    _
  $region43: #{fcqsa_forward.1} parent=0 // pred_check_branch
    %332 = sbr.rel (0) target = $region45
  $region44: #{fcqsa_forward.1} parent=0 // pred_region
    _
  $region45: #{fcqsa_forward.1} parent=0 // pred_fallthru
    _

</llo_original>
